<compile_context>
chip_gen: v7x
topology: tpu7x:2x2x1
jax: 0.10.0
libtpu: 0.0.40
codegen_flags: <defaults>
</compile_context>

<pallas_src>
import jax
import jax.numpy as jnp
from jax.experimental import pallas as pl
from jax.experimental.pallas import tpu as pltpu


# ----------------------------------------------------------------------------
# Kernel
# ----------------------------------------------------------------------------
def _identity_kernel(x_ref, o_ref):
    # Straight VMEM tile copy; no compute.
    o_ref[...] = x_ref[...]


# ----------------------------------------------------------------------------
# Sizing helpers
# ----------------------------------------------------------------------------
def _default_vmem_limit():
    """Generation-aware scoped-VMEM budget.

    ~half of physical VMEM: 64 MiB on v5e/v6e (128 MiB physical), and the
    conservative 32 MiB fallback is safe on v7x (64 MiB per TensorCore)."""
    try:
        phys = int(getattr(pltpu.get_tpu_info(), "vmem_capacity_bytes"))
        return int(min(64 << 20, max(16 << 20, phys // 2)))
    except Exception:
        return 32 << 20


_VMEM_LIMIT_BYTES = _default_vmem_limit()

# Below this, skip the kernel entirely: identity == return x.
_TINY_BYTES = 1 << 20


def _lane_dense_view(x):
    """2-D (rows, lanes) view with lanes a large multiple of 128 when possible.

    Falls back to keeping the original last (lane) axis whole otherwise."""
    n = x.size
    for lanes in (8192, 4096, 2048, 1024, 512, 256, 128):
        if n % lanes == 0:
            return x.reshape(n // lanes, lanes)
    if x.ndim >= 2:
        return x.reshape(-1, x.shape[-1])
    return x.reshape(1, n)


def _pick_row_tile(n_rows, n_cols, itemsize, vmem_limit_bytes):
    """Row tile sized by bytes: target ~vmem_limit/4 per live tile
    (double-buffered input + double-buffered output)."""
    per_tile_budget = max(1, vmem_limit_bytes // 4)
    bytes_per_row = max(1, n_cols * itemsize)
    rows_fit = per_tile_budget // bytes_per_row
    if rows_fit >= 32:
        # Round to 32: native sublane packing for f32 (8), bf16 (16), int8/fp8 (32).
        rows_fit = (rows_fit // 32) * 32
    else:
        rows_fit = max(8, (rows_fit // 8) * 8)
    if n_rows <= rows_fit:
        return n_rows  # single full-extent block
    return rows_fit


# ----------------------------------------------------------------------------
# Pallas identity path
# ----------------------------------------------------------------------------
@jax.jit
def _pallas_identity(x):
    orig_shape = x.shape
    x2 = _lane_dense_view(x)
    R, C = x2.shape
    itemsize = x2.dtype.itemsize

    tile_r = _pick_row_tile(R, C, itemsize, _VMEM_LIMIT_BYTES)
    grid = (pl.cdiv(R, tile_r),)

    out = pl.pallas_call(
        _identity_kernel,
        out_shape=jax.ShapeDtypeStruct((R, C), x2.dtype),
        grid=grid,
        in_specs=[pl.BlockSpec((tile_r, C), lambda i: (i, 0))],
        out_specs=pl.BlockSpec((tile_r, C), lambda i: (i, 0)),
        # Output aliases the input buffer: in-place identity, no extra allocation.
        input_output_aliases={0: 0},
        compiler_params=pltpu.CompilerParams(
            # Row axis is independent -> shard across v7x's 2 TCs; free on v5e/v6e.
            dimension_semantics=("parallel",),
            vmem_limit_bytes=_VMEM_LIMIT_BYTES,
        ),
        cost_estimate=pl.CostEstimate(
            flops=0,
            transcendentals=0,
            bytes_accessed=2 * R * C * itemsize,
        ),
    )(x2)
    return out.reshape(orig_shape)


# ----------------------------------------------------------------------------
# Public forward
# ----------------------------------------------------------------------------
def coxph_head_forward(x, *, force_pallas=False):
    """CoxPHHead.forward: identity pass-through.

    Default path returns x (zero HBM traffic, zero launch cost).  The Pallas
    copy path is used only for large tensors or when explicitly forced (e.g.
    to stage data through an on-device kernel for testing)."""
    if x.ndim == 0 or x.size == 0:
        return x
    nbytes = x.size * x.dtype.itemsize
    if not force_pallas and nbytes < _TINY_BYTES:
        return x
    return _pallas_identity(x)


if __name__ == "__main__":
    key = jax.random.PRNGKey(0)
    k1, k2, k3 = jax.random.split(key, 3)

    # Shapes the forward implies: a feature block (batch, input_dim) or a flat
    # vector of risk scores (batch,); plus one lane-dense-friendly block.
    batch, input_dim = 8, 32
    x_feat = jax.random.normal(k1, (batch, input_dim), dtype=jnp.float32)
    x_risk = jax.random.normal(k2, (batch,), dtype=jnp.float32)
    x_wide = jax.random.normal(k3, (4, 512), dtype=jnp.float32)

    # Production path: tiny tensors short-circuit (no kernel, no HBM traffic).
    y_fast = coxph_head_forward(x_feat)
    # Kernel path: force the Pallas identity so the kernel compiles & runs on TPU.
    y_feat = coxph_head_forward(x_feat, force_pallas=True)
    y_risk = coxph_head_forward(x_risk, force_pallas=True)
    y_wide = coxph_head_forward(x_wide, force_pallas=True)
    jax.block_until_ready((y_fast, y_feat, y_risk, y_wide))

    # forward() is the identity -> outputs must match inputs exactly.
    for inp, out in ((x_feat, y_fast), (x_feat, y_feat),
                     (x_risk, y_risk), (x_wide, y_wide)):
        assert out.shape == inp.shape and out.dtype == inp.dtype
        assert jnp.array_equal(out, inp)

    # TODO(synk): CoxPHHead.loss() (argsort over times, cumsum risk set, torch.unique
    # event times, per-event-time baseline-hazard loop) has data-dependent output
    # shapes and no clean Pallas equivalent; it stays as host-side training glue.
    print("KERNEL_OK")
</pallas_src>

<mosaic_0001>
module attributes {stable_mosaic.version = 11 : i64} {
  func.func @_identity_kernel(%arg0: i32, %arg1: memref<1x256xf32, #tpu.memory_space<vmem>>, %arg2: memref<1x256xf32, #tpu.memory_space<vmem>>) attributes {dimension_semantics = [#tpu.dimension_semantics<parallel>], iteration_bounds = array<i64: 1>, scalar_prefetch = 0 : i64, scratch_operands = 0 : i64, tpu.core_type = #tpu.core_type<tc>, window_params = [{transform_indices = @transform_0, window_bounds = array<i64: 1, 256>}, {transform_indices = @transform_1, window_bounds = array<i64: 1, 256>}]} {
    %c0 = arith.constant 0 : index
    %c0_0 = arith.constant 0 : index
    %0 = vector.load %arg1[%c0, %c0_0] : memref<1x256xf32, #tpu.memory_space<vmem>>, vector<1x256xf32>
    %c0_1 = arith.constant 0 : index
    %c0_2 = arith.constant 0 : index
    %1 = vector.load %arg2[%c0_1, %c0_2] : memref<1x256xf32, #tpu.memory_space<vmem>>, vector<1x256xf32>
    tpu.vector_store %arg2[%c0_1, %c0_2], %0 {strides = array<i32>} : memref<1x256xf32, #tpu.memory_space<vmem>>, vector<1x256xf32>,
    return
  }
  func.func @transform_0(%arg0: i32) -> (i32, i32) {
    %c0_i32 = arith.constant 0 : i32
    %c0_i32_0 = arith.constant 0 : i32
    return %arg0, %c0_i32 : i32, i32
  }
  func.func @transform_1(%arg0: i32) -> (i32, i32) {
    %c0_i32 = arith.constant 0 : i32
    %c0_i32_0 = arith.constant 0 : i32
    return %arg0, %c0_i32 : i32, i32
  }
}

</mosaic_0001>

<llo_original>
// kernel: _pallas_identity.1
$region0: #{_pallas_identity.1}
  #allocation0 [shape = 'u32[]', space=smem, size = 0x4, offset = 0x4, fixed_abs, tag = 'smem constant byte address 0x4 - core index']
  #allocation1 [shape = 'u32[144,128]{1,0:T(1,128)}', space=vmem, size = 0x12000, scoped, tag = 'internal scratch']
  %s0 = inlined_call_operand.vmem [shape: f32[1,256], index: 0, kind: input, shape index: {}, may-alias: {0,1}]
  %s1 = inlined_call_operand.vmem [shape: f32[1,256], index: 1, kind: output, shape index: {}, may-alias: {0,1}]
  %s2 = sld [smem:[#allocation0]]
  $region14: #{_pallas_identity.1} parent=0
    _
  %s4 = ssub.s32 1, %s2
  %s5 = scalar_select 0, %s4, %s2
  // Predicated region
  $region2: #{_pallas_identity.1} parent=0 // pred_check
    _
  $region3: #{_pallas_identity.1} parent=0 // pred_check_branch
    %7 = sbr.rel (0) target = $region5
  $region4: #{_pallas_identity.1} parent=0 // pred_region
    _
  $region5: #{_pallas_identity.1} parent=0 // pred_fallthru
    _
  %v8 = vld [vmem:[%s0] sm:$0x3]
  %v9 = vlaneseq
  %vm10 = vcmp.ge.s32.totalorder %v9, 0
  %vm11 = vcmp.lt.s32.totalorder %v9, 256
  %vm12 = vmand %vm10, %vm11
  %13 = vst.msk [vmem:[%s1] sm:$0x3] %vm12, %v8
  // Predicated region
  $region6: #{_pallas_identity.1} parent=0 // pred_check
    _
  $region7: #{_pallas_identity.1} parent=0 // pred_check_branch
    %15 = sbr.rel (0) target = $region9
  $region8: #{_pallas_identity.1} parent=0 // pred_region
    _
  $region9: #{_pallas_identity.1} parent=0 // pred_fallthru
    _
  // Predicated region
  $region10: #{_pallas_identity.1} parent=0 // pred_check
    _
  $region11: #{_pallas_identity.1} parent=0 // pred_check_branch
    %17 = sbr.rel (0) target = $region13
  $region12: #{_pallas_identity.1} parent=0 // pred_region
    _
  $region13: #{_pallas_identity.1} parent=0 // pred_fallthru
    _

</llo_original>
